<compile_context>
chip_gen: v6e
topology: v6e:2x2x1
jax: 0.10.0
libtpu: 0.0.40
codegen_flags: <defaults>
</compile_context>

<pallas_src>
import functools

import jax
import jax.numpy as jnp
from jax import lax
from jax.experimental import pallas as pl
from jax.experimental.pallas import tpu as pltpu


def _round_up(x: int, m: int) -> int:
    return ((x + m - 1) // m) * m


def _pad_to(a, shape):
    return jnp.pad(a, tuple((0, s - d) for d, s in zip(a.shape, shape)))


def _make_rnn_kernel(seq_len, chunk_ts, mask_tail, compute_dtype):
    """Kernel factory; static config closed over at trace time."""

    def kernel(x_ref, h0_ref, w_ih_ref, w_hh_ref, b_ref, w_fc_ref, b_fc_ref,
               out_ref, hn_ref, h_scr, xproj_scr):
        # Grid: (batch tile [parallel], sequence chunk [arbitrary]).
        c = pl.program_id(1)
        nc = pl.num_programs(1)
        tb = h0_ref.shape[0]

        @pl.when(c == 0)
        def _():
            h_scr[...] = h0_ref[...]

        # ---- Hoisted input projection: ONE MXU pass for the whole chunk ----
        # x_proj = x @ W_ih^T + (b_ih + b_hh)   (bias folded in, added once).
        # x_ref block is (1, 1, TS*TB, Ip): pre-flattened in the wrapper so no
        # in-kernel reshape is needed; Ip is the (small) true lane width.
        xm = x_ref[0, 0].astype(compute_dtype)                     # (TS*TB, Ip)
        xproj_scr[...] = (
            jnp.dot(xm, w_ih_ref[...], preferred_element_type=jnp.float32)
            + b_ref[...])

        # ---- Serial recurrence: h = tanh(x_proj[t] + h @ W_hh) ----
        def step(i, h):
            row = pl.multiple_of(i * tb, 8)
            x_t = xproj_scr[pl.ds(row, tb), :]                     # (TB, Hp)
            h_new = jnp.tanh(
                x_t + jnp.dot(h.astype(compute_dtype), w_hh_ref[...],
                              preferred_element_type=jnp.float32))
            if mask_tail:  # only emitted when S was padded up to a chunk
                h_new = jnp.where(c * chunk_ts + i < seq_len, h_new, h)
            return h_new

        h = lax.fori_loop(0, chunk_ts, step, h_scr[...], unroll=True)
        h_scr[...] = h

        # ---- Finalize on the last chunk: fc head + hidden writeback ----
        @pl.when(c == nc - 1)
        def _():
            hn_ref[...] = h
            out_ref[...] = (
                jnp.dot(h.astype(compute_dtype), w_fc_ref[...],
                        preferred_element_type=jnp.float32) + b_fc_ref[...])

    return kernel


def prepare_params(params, weight_dtype=jnp.float32):
    """One-time prep (out of the per-call path): transpose weights to
    row-major `x @ W` form, combine the two RNN biases, zero-pad to aligned
    shapes (I -> multiple of 8 only, H/O -> multiples of 128), optionally cast
    matmul weights to bf16."""
    H, I = params["w_ih"].shape          # PyTorch (H, I)
    O = params["w_fc"].shape[0]          # PyTorch (O, H)
    Ip = _round_up(I, 8)                 # keep x's lane width small
    Hp, Op = _round_up(H, 128), _round_up(O, 128)
    return {
        "w_ih": _pad_to(params["w_ih"].T, (Ip, Hp)).astype(weight_dtype),
        "w_hh": _pad_to(params["w_hh"].T, (Hp, Hp)).astype(weight_dtype),
        "b":    _pad_to((params["b_ih"] + params["b_hh"]).reshape(1, H),
                        (1, Hp)),
        "w_fc": _pad_to(params["w_fc"].T, (Hp, Op)).astype(weight_dtype),
        "b_fc": _pad_to(params["b_fc"].reshape(1, O), (1, Op)),
    }


@functools.partial(jax.jit, static_argnames=("out_size", "chunk_len"))
def rnn_forward(x, hidden, prepped, *, out_size, chunk_len=16):
    """x: (B, S, I) f32; hidden: (1, B, H) f32 -> (out (B, O), hidden (1, B, H))."""
    B, S, I = x.shape
    H = hidden.shape[2]
    Ip, Hp = prepped["w_ih"].shape
    Op = prepped["w_fc"].shape[1]
    compute_dtype = prepped["w_hh"].dtype

    # Batch tiling: sublane-aligned, capped at 128 rows/tile so large batches
    # split into several "parallel" grid tiles (megacore sharding on v7x).
    TB = min(_round_up(B, 8), 128)
    Bp = _round_up(B, TB)
    nb = Bp // TB

    # Sequence chunking: "arbitrary" axis; x chunks are double-buffered by the
    # BlockSpec pipeline so DMA of chunk c+1 overlaps the recurrence on c.
    TS = min(chunk_len, S)
    Sp = _round_up(S, TS)
    nc = Sp // TS
    mask_tail = Sp != S

    # Per-call layout glue only (weights prepared once, out of this path):
    # time-major, zero-pad, then pre-flatten each (chunk, batch-tile) into a
    # 2D (TS*TB, Ip) slab.  x keeps its small true lane width (Ip = round_up
    # (I, 8)) instead of being padded to 128 lanes -> far less HBM DMA.
    x_pad = _pad_to(jnp.transpose(x, (1, 0, 2)), (Sp, Bp, Ip))   # (Sp, Bp, Ip)
    x_blk = (x_pad.reshape(nc, TS, nb, TB, Ip)
                  .transpose(0, 2, 1, 3, 4)
                  .reshape(nc, nb, TS * TB, Ip))                 # (nc,nb,TS*TB,Ip)
    h0_pad = _pad_to(hidden[0], (Bp, Hp))                        # (Bp, Hp)

    kernel = _make_rnn_kernel(S, TS, mask_tail, compute_dtype)

    # Explicit VMEM budget (keeps us honest on v7x's 64 MiB VMEM).
    wbytes = ((prepped["w_ih"].size + prepped["w_hh"].size
               + prepped["w_fc"].size) * prepped["w_hh"].dtype.itemsize)
    lane_ip = _round_up(Ip, 128)                      # VMEM tiles pad lanes
    vmem_est = (2 * TS * TB * lane_ip * 4             # double-buffered x chunks
                + 2 * wbytes                          # resident weights
                + 2 * (Hp + Op) * 4                   # biases
                + 2 * (2 * TB * Hp + TB * Op) * 4     # h0 in + out + h_N bufs
                + (TS * TB * Hp + TB * Hp) * 4)       # VMEM scratches
    vmem_limit = int(min(max(2 * vmem_est, 8 << 20), 128 << 20))

    out_pad, hn_pad = pl.pallas_call(
        kernel,
        out_shape=(
            jax.ShapeDtypeStruct((Bp, Op), jnp.float32),
            jax.ShapeDtypeStruct((Bp, Hp), jnp.float32),
        ),
        grid_spec=pltpu.PrefetchScalarGridSpec(
            num_scalar_prefetch=0,
            grid=(nb, nc),
            in_specs=[
                pl.BlockSpec((1, 1, TS * TB, Ip), lambda b, c: (c, b, 0, 0)),  # x
                pl.BlockSpec((TB, Hp), lambda b, c: (b, 0)),          # h0
                pl.BlockSpec((Ip, Hp), lambda b, c: (0, 0)),          # W_ih^T
                pl.BlockSpec((Hp, Hp), lambda b, c: (0, 0)),          # W_hh^T
                pl.BlockSpec((1, Hp), lambda b, c: (0, 0)),           # b_ih+b_hh
                pl.BlockSpec((Hp, Op), lambda b, c: (0, 0)),          # W_fc^T
                pl.BlockSpec((1, Op), lambda b, c: (0, 0)),           # b_fc
            ],
            out_specs=(
                pl.BlockSpec((TB, Op), lambda b, c: (b, 0)),          # out
                pl.BlockSpec((TB, Hp), lambda b, c: (b, 0)),          # h_N
            ),
            scratch_shapes=[
                pltpu.VMEM((TB, Hp), jnp.float32),        # carried hidden state
                pltpu.VMEM((TS * TB, Hp), jnp.float32),   # hoisted x projection
            ],
        ),
        input_output_aliases={1: 1},   # reuse h0's HBM buffer for h_N
        compiler_params=pltpu.CompilerParams(
            dimension_semantics=("parallel", "arbitrary"),
            vmem_limit_bytes=vmem_limit,
        ),
    )(x_blk, h0_pad, prepped["w_ih"], prepped["w_hh"], prepped["b"],
      prepped["w_fc"], prepped["b_fc"])

    out = out_pad[:B, :out_size]
    h_n = hn_pad[:B, :H][None, :, :]
    return out, h_n


def init_params(key, input_size, hidden_size, output_size):
    """PyTorch-convention shapes, uniform(-1/sqrt(H), 1/sqrt(H)) init."""
    ks = jax.random.split(key, 6)
    s = 1.0 / jnp.sqrt(hidden_size)
    return {
        "w_ih": jax.random.uniform(ks[0], (hidden_size, input_size),
                                   jnp.float32, -s, s),
        "w_hh": jax.random.uniform(ks[1], (hidden_size, hidden_size),
                                   jnp.float32, -s, s),
        "b_ih": jax.random.uniform(ks[2], (hidden_size,), jnp.float32, -s, s),
        "b_hh": jax.random.uniform(ks[3], (hidden_size,), jnp.float32, -s, s),
        "w_fc": jax.random.uniform(ks[4], (output_size, hidden_size),
                                   jnp.float32, -s, s),
        "b_fc": jax.random.uniform(ks[5], (output_size,), jnp.float32, -s, s),
    }


def _reference_forward(x, hidden, params):
    """Pure-JAX reference of the PyTorch forward."""
    h = hidden[0]
    for t in range(x.shape[1]):
        h = jnp.tanh(x[:, t, :] @ params["w_ih"].T + params["b_ih"]
                     + h @ params["w_hh"].T + params["b_hh"])
    out = h @ params["w_fc"].T + params["b_fc"]
    return out, h[None]


if __name__ == "__main__":
    batch, seq_len = 2, 8
    input_size, hidden_size, output_size = 4, 32, 4

    key = jax.random.PRNGKey(0)
    k_x, k_h, k_p = jax.random.split(key, 3)

    x = jax.random.normal(k_x, (batch, seq_len, input_size), jnp.float32)
    hidden0 = jax.random.normal(k_h, (1, batch, hidden_size), jnp.float32)
    params = init_params(k_p, input_size, hidden_size, output_size)

    ref_out, ref_hidden = _reference_forward(x, hidden0, params)

    # --- f32 weights: tight accuracy check ---
    prepped = prepare_params(params)
    out, hidden_n = rnn_forward(x, hidden0, prepped, out_size=output_size)
    out = jax.block_until_ready(out)
    hidden_n = jax.block_until_ready(hidden_n)

    assert out.shape == (batch, output_size)
    assert hidden_n.shape == (1, batch, hidden_size)
    assert jnp.allclose(out, ref_out, atol=1e-4, rtol=1e-4)
    assert jnp.allclose(hidden_n, ref_hidden, atol=1e-4, rtol=1e-4)

    # --- bf16 weights (f32 accumulation): MXU-native path, loose check ---
    prepped_bf16 = prepare_params(params, weight_dtype=jnp.bfloat16)
    out_b, hid_b = rnn_forward(x, hidden0, prepped_bf16, out_size=output_size)
    out_b = jax.block_until_ready(out_b)
    assert out_b.shape == (batch, output_size)
    assert bool(jnp.all(jnp.isfinite(out_b)))
    assert float(jnp.max(jnp.abs(out_b - ref_out))) < 0.25

    print("KERNEL_OK")
</pallas_src>

<mosaic_0001>
module attributes {stable_mosaic.version = 11 : i64} {
  func.func @kernel(%arg0: i32, %arg1: i32, %arg2: memref<1x1x64x8xf32, #tpu.memory_space<vmem>>, %arg3: memref<8x128xf32, #tpu.memory_space<vmem>>, %arg4: memref<8x128xf32, #tpu.memory_space<vmem>>, %arg5: memref<128x128xf32, #tpu.memory_space<vmem>>, %arg6: memref<1x128xf32, #tpu.memory_space<vmem>>, %arg7: memref<128x128xf32, #tpu.memory_space<vmem>>, %arg8: memref<1x128xf32, #tpu.memory_space<vmem>>, %arg9: memref<8x128xf32, #tpu.memory_space<vmem>>, %arg10: memref<8x128xf32, #tpu.memory_space<vmem>>, %arg11: memref<8x128xf32, #tpu.memory_space<vmem>>, %arg12: memref<64x128xf32, #tpu.memory_space<vmem>>) attributes {dimension_semantics = [#tpu.dimension_semantics<parallel>, #tpu.dimension_semantics<arbitrary>], iteration_bounds = array<i64: 1, 1>, scalar_prefetch = 0 : i64, scratch_operands = 2 : i64, tpu.core_type = #tpu.core_type<tc>, window_params = [{transform_indices = @transform_0, window_bounds = array<i64: 1, 1, 64, 8>}, {transform_indices = @transform_1, window_bounds = array<i64: 8, 128>}, {pipeline_mode = #tpu.pipeline_mode<synchronous>, transform_indices = @transform_2, window_bounds = array<i64: 8, 128>}, {pipeline_mode = #tpu.pipeline_mode<synchronous>, transform_indices = @transform_3, window_bounds = array<i64: 128, 128>}, {pipeline_mode = #tpu.pipeline_mode<synchronous>, transform_indices = @transform_4, window_bounds = array<i64: 1, 128>}, {pipeline_mode = #tpu.pipeline_mode<synchronous>, transform_indices = @transform_5, window_bounds = array<i64: 128, 128>}, {pipeline_mode = #tpu.pipeline_mode<synchronous>, transform_indices = @transform_6, window_bounds = array<i64: 1, 128>}, {transform_indices = @transform_7, window_bounds = array<i64: 8, 128>}, {transform_indices = @transform_8, window_bounds = array<i64: 8, 128>}]} {
    %c0_i32 = arith.constant 0 : i32
    %0 = arith.cmpi eq, %arg1, %c0_i32 : i32
    %1 = arith.extui %0 : i1 to i32
    %c0_i32_0 = arith.constant 0 : i32
    %2 = arith.cmpi ne, %1, %c0_i32_0 : i32
    scf.if %2 {
      %c0_57 = arith.constant 0 : index
      %c0_58 = arith.constant 0 : index
      %80 = vector.load %arg3[%c0_57, %c0_58] : memref<8x128xf32, #tpu.memory_space<vmem>>, vector<8x128xf32>
      %c0_59 = arith.constant 0 : index
      %c0_60 = arith.constant 0 : index
      %81 = vector.load %arg11[%c0_59, %c0_60] : memref<8x128xf32, #tpu.memory_space<vmem>>, vector<8x128xf32>
      tpu.vector_store %arg11[%c0_59, %c0_60], %80 {strides = array<i32>} : memref<8x128xf32, #tpu.memory_space<vmem>>, vector<8x128xf32>,
    } else {
    }
    %c0 = arith.constant 0 : index
    %c0_1 = arith.constant 0 : index
    %c0_2 = arith.constant 0 : index
    %c0_3 = arith.constant 0 : index
    %3 = vector.load %arg2[%c0, %c0_1, %c0_2, %c0_3] : memref<1x1x64x8xf32, #tpu.memory_space<vmem>>, vector<1x1x64x8xf32>
    %4 = vector.shape_cast %3 : vector<1x1x64x8xf32> to vector<64x8xf32>
    %c0_4 = arith.constant 0 : index
    %c0_5 = arith.constant 0 : index
    %5 = vector.load %arg4[%c0_4, %c0_5] : memref<8x128xf32, #tpu.memory_space<vmem>>, vector<8x128xf32>
    %cst = arith.constant dense<0.000000e+00> : vector<64x128xf32>
    %6 = tpu.matmul %4, %5, %cst {dimension_numbers = #tpu.dot_dimension_numbers<[1], [0], [0], [1], [0, 0, 1, 1], [], []>} : vector<64x8xf32>, vector<8x128xf32>, vector<64x128xf32> -> vector<64x128xf32>
    %c0_6 = arith.constant 0 : index
    %c0_7 = arith.constant 0 : index
    %7 = vector.load %arg6[%c0_6, %c0_7] : memref<1x128xf32, #tpu.memory_space<vmem>>, vector<1x128xf32>
    %8 = vector.broadcast %7 : vector<1x128xf32> to vector<64x128xf32>
    %9 = arith.addf %6, %8 : vector<64x128xf32>
    %c0_8 = arith.constant 0 : index
    %c0_9 = arith.constant 0 : index
    %10 = vector.load %arg12[%c0_8, %c0_9] : memref<64x128xf32, #tpu.memory_space<vmem>>, vector<64x128xf32>
    tpu.vector_store %arg12[%c0_8, %c0_9], %9 {strides = array<i32>} : memref<64x128xf32, #tpu.memory_space<vmem>>, vector<64x128xf32>,
    %c0_10 = arith.constant 0 : index
    %c0_11 = arith.constant 0 : index
    %11 = vector.load %arg11[%c0_10, %c0_11] : memref<8x128xf32, #tpu.memory_space<vmem>>, vector<8x128xf32>
    %c0_i32_12 = arith.constant 0 : i32
    %c8_i32 = arith.constant 8 : i32
    %12 = arith.muli %c0_i32_12, %c8_i32 : i32
    %13 = tpu.assume_multiple %12, 8 : i32
    %14 = arith.index_cast %13 : i32 to index
    %c0_13 = arith.constant 0 : index
    %15 = vector.load %arg12[%14, %c0_13] : memref<64x128xf32, #tpu.memory_space<vmem>>, vector<8x128xf32>
    %c0_14 = arith.constant 0 : index
    %c0_15 = arith.constant 0 : index
    %16 = vector.load %arg5[%c0_14, %c0_15] : memref<128x128xf32, #tpu.memory_space<vmem>>, vector<128x128xf32>
    %cst_16 = arith.constant dense<0.000000e+00> : vector<8x128xf32>
    %17 = tpu.matmul %11, %16, %cst_16 {dimension_numbers = #tpu.dot_dimension_numbers<[1], [0], [0], [1], [0, 0, 1, 1], [], []>} : vector<8x128xf32>, vector<128x128xf32>, vector<8x128xf32> -> vector<8x128xf32>
    %18 = arith.addf %15, %17 : vector<8x128xf32>
    %19 = math.tanh %18 : vector<8x128xf32>
    %c1_i32 = arith.constant 1 : i32
    %c8_i32_17 = arith.constant 8 : i32
    %20 = arith.muli %c1_i32, %c8_i32_17 : i32
    %21 = tpu.assume_multiple %20, 8 : i32
    %22 = arith.index_cast %21 : i32 to index
    %c0_18 = arith.constant 0 : index
    %23 = vector.load %arg12[%22, %c0_18] : memref<64x128xf32, #tpu.memory_space<vmem>>, vector<8x128xf32>
    %c0_19 = arith.constant 0 : index
    %c0_20 = arith.constant 0 : index
    %24 = vector.load %arg5[%c0_19, %c0_20] : memref<128x128xf32, #tpu.memory_space<vmem>>, vector<128x128xf32>
    %cst_21 = arith.constant dense<0.000000e+00> : vector<8x128xf32>
    %25 = tpu.matmul %19, %24, %cst_21 {dimension_numbers = #tpu.dot_dimension_numbers<[1], [0], [0], [1], [0, 0, 1, 1], [], []>} : vector<8x128xf32>, vector<128x128xf32>, vector<8x128xf32> -> vector<8x128xf32>
    %26 = arith.addf %23, %25 : vector<8x128xf32>
    %27 = math.tanh %26 : vector<8x128xf32>
    %c2_i32 = arith.constant 2 : i32
    %c8_i32_22 = arith.constant 8 : i32
    %28 = arith.muli %c2_i32, %c8_i32_22 : i32
    %29 = tpu.assume_multiple %28, 8 : i32
    %30 = arith.index_cast %29 : i32 to index
    %c0_23 = arith.constant 0 : index
    %31 = vector.load %arg12[%30, %c0_23] : memref<64x128xf32, #tpu.memory_space<vmem>>, vector<8x128xf32>
    %c0_24 = arith.constant 0 : index
    %c0_25 = arith.constant 0 : index
    %32 = vector.load %arg5[%c0_24, %c0_25] : memref<128x128xf32, #tpu.memory_space<vmem>>, vector<128x128xf32>
    %cst_26 = arith.constant dense<0.000000e+00> : vector<8x128xf32>
    %33 = tpu.matmul %27, %32, %cst_26 {dimension_numbers = #tpu.dot_dimension_numbers<[1], [0], [0], [1], [0, 0, 1, 1], [], []>} : vector<8x128xf32>, vector<128x128xf32>, vector<8x128xf32> -> vector<8x128xf32>
    %34 = arith.addf %31, %33 : vector<8x128xf32>
    %35 = math.tanh %34 : vector<8x128xf32>
    %c3_i32 = arith.constant 3 : i32
    %c8_i32_27 = arith.constant 8 : i32
    %36 = arith.muli %c3_i32, %c8_i32_27 : i32
    %37 = tpu.assume_multiple %36, 8 : i32
    %38 = arith.index_cast %37 : i32 to index
    %c0_28 = arith.constant 0 : index
    %39 = vector.load %arg12[%38, %c0_28] : memref<64x128xf32, #tpu.memory_space<vmem>>, vector<8x128xf32>
    %c0_29 = arith.constant 0 : index
    %c0_30 = arith.constant 0 : index
    %40 = vector.load %arg5[%c0_29, %c0_30] : memref<128x128xf32, #tpu.memory_space<vmem>>, vector<128x128xf32>
    %cst_31 = arith.constant dense<0.000000e+00> : vector<8x128xf32>
    %41 = tpu.matmul %35, %40, %cst_31 {dimension_numbers = #tpu.dot_dimension_numbers<[1], [0], [0], [1], [0, 0, 1, 1], [], []>} : vector<8x128xf32>, vector<128x128xf32>, vector<8x128xf32> -> vector<8x128xf32>
    %42 = arith.addf %39, %41 : vector<8x128xf32>
    %43 = math.tanh %42 : vector<8x128xf32>
    %c4_i32 = arith.constant 4 : i32
    %c8_i32_32 = arith.constant 8 : i32
    %44 = arith.muli %c4_i32, %c8_i32_32 : i32
    %45 = tpu.assume_multiple %44, 8 : i32
    %46 = arith.index_cast %45 : i32 to index
    %c0_33 = arith.constant 0 : index
    %47 = vector.load %arg12[%46, %c0_33] : memref<64x128xf32, #tpu.memory_space<vmem>>, vector<8x128xf32>
    %c0_34 = arith.constant 0 : index
    %c0_35 = arith.constant 0 : index
    %48 = vector.load %arg5[%c0_34, %c0_35] : memref<128x128xf32, #tpu.memory_space<vmem>>, vector<128x128xf32>
    %cst_36 = arith.constant dense<0.000000e+00> : vector<8x128xf32>
    %49 = tpu.matmul %43, %48, %cst_36 {dimension_numbers = #tpu.dot_dimension_numbers<[1], [0], [0], [1], [0, 0, 1, 1], [], []>} : vector<8x128xf32>, vector<128x128xf32>, vector<8x128xf32> -> vector<8x128xf32>
    %50 = arith.addf %47, %49 : vector<8x128xf32>
    %51 = math.tanh %50 : vector<8x128xf32>
    %c5_i32 = arith.constant 5 : i32
    %c8_i32_37 = arith.constant 8 : i32
    %52 = arith.muli %c5_i32, %c8_i32_37 : i32
    %53 = tpu.assume_multiple %52, 8 : i32
    %54 = arith.index_cast %53 : i32 to index
    %c0_38 = arith.constant 0 : index
    %55 = vector.load %arg12[%54, %c0_38] : memref<64x128xf32, #tpu.memory_space<vmem>>, vector<8x128xf32>
    %c0_39 = arith.constant 0 : index
    %c0_40 = arith.constant 0 : index
    %56 = vector.load %arg5[%c0_39, %c0_40] : memref<128x128xf32, #tpu.memory_space<vmem>>, vector<128x128xf32>
    %cst_41 = arith.constant dense<0.000000e+00> : vector<8x128xf32>
    %57 = tpu.matmul %51, %56, %cst_41 {dimension_numbers = #tpu.dot_dimension_numbers<[1], [0], [0], [1], [0, 0, 1, 1], [], []>} : vector<8x128xf32>, vector<128x128xf32>, vector<8x128xf32> -> vector<8x128xf32>
    %58 = arith.addf %55, %57 : vector<8x128xf32>
    %59 = math.tanh %58 : vector<8x128xf32>
    %c6_i32 = arith.constant 6 : i32
    %c8_i32_42 = arith.constant 8 : i32
    %60 = arith.muli %c6_i32, %c8_i32_42 : i32
    %61 = tpu.assume_multiple %60, 8 : i32
    %62 = arith.index_cast %61 : i32 to index
    %c0_43 = arith.constant 0 : index
    %63 = vector.load %arg12[%62, %c0_43] : memref<64x128xf32, #tpu.memory_space<vmem>>, vector<8x128xf32>
    %c0_44 = arith.constant 0 : index
    %c0_45 = arith.constant 0 : index
    %64 = vector.load %arg5[%c0_44, %c0_45] : memref<128x128xf32, #tpu.memory_space<vmem>>, vector<128x128xf32>
    %cst_46 = arith.constant dense<0.000000e+00> : vector<8x128xf32>
    %65 = tpu.matmul %59, %64, %cst_46 {dimension_numbers = #tpu.dot_dimension_numbers<[1], [0], [0], [1], [0, 0, 1, 1], [], []>} : vector<8x128xf32>, vector<128x128xf32>, vector<8x128xf32> -> vector<8x128xf32>
    %66 = arith.addf %63, %65 : vector<8x128xf32>
    %67 = math.tanh %66 : vector<8x128xf32>
    %c7_i32 = arith.constant 7 : i32
    %c8_i32_47 = arith.constant 8 : i32
    %68 = arith.muli %c7_i32, %c8_i32_47 : i32
    %69 = tpu.assume_multiple %68, 8 : i32
    %70 = arith.index_cast %69 : i32 to index
    %c0_48 = arith.constant 0 : index
    %71 = vector.load %arg12[%70, %c0_48] : memref<64x128xf32, #tpu.memory_space<vmem>>, vector<8x128xf32>
    %c0_49 = arith.constant 0 : index
    %c0_50 = arith.constant 0 : index
    %72 = vector.load %arg5[%c0_49, %c0_50] : memref<128x128xf32, #tpu.memory_space<vmem>>, vector<128x128xf32>
    %cst_51 = arith.constant dense<0.000000e+00> : vector<8x128xf32>
    %73 = tpu.matmul %67, %72, %cst_51 {dimension_numbers = #tpu.dot_dimension_numbers<[1], [0], [0], [1], [0, 0, 1, 1], [], []>} : vector<8x128xf32>, vector<128x128xf32>, vector<8x128xf32> -> vector<8x128xf32>
    %74 = arith.addf %71, %73 : vector<8x128xf32>
    %75 = math.tanh %74 : vector<8x128xf32>
    %c8_i32_52 = arith.constant 8 : i32
    %c0_53 = arith.constant 0 : index
    %c0_54 = arith.constant 0 : index
    %76 = vector.load %arg11[%c0_53, %c0_54] : memref<8x128xf32, #tpu.memory_space<vmem>>, vector<8x128xf32>
    tpu.vector_store %arg11[%c0_53, %c0_54], %75 {strides = array<i32>} : memref<8x128xf32, #tpu.memory_space<vmem>>, vector<8x128xf32>,
    %c0_i32_55 = arith.constant 0 : i32
    %77 = arith.cmpi eq, %arg1, %c0_i32_55 : i32
    %78 = arith.extui %77 : i1 to i32
    %c0_i32_56 = arith.constant 0 : i32
    %79 = arith.cmpi ne, %78, %c0_i32_56 : i32
    scf.if %79 {
      %c0_57 = arith.constant 0 : index
      %c0_58 = arith.constant 0 : index
      %80 = vector.load %arg10[%c0_57, %c0_58] : memref<8x128xf32, #tpu.memory_space<vmem>>, vector<8x128xf32>
      tpu.vector_store %arg10[%c0_57, %c0_58], %75 {strides = array<i32>} : memref<8x128xf32, #tpu.memory_space<vmem>>, vector<8x128xf32>,
      %c0_59 = arith.constant 0 : index
      %c0_60 = arith.constant 0 : index
      %81 = vector.load %arg7[%c0_59, %c0_60] : memref<128x128xf32, #tpu.memory_space<vmem>>, vector<128x128xf32>
      %cst_61 = arith.constant dense<0.000000e+00> : vector<8x128xf32>
      %82 = tpu.matmul %75, %81, %cst_61 {dimension_numbers = #tpu.dot_dimension_numbers<[1], [0], [0], [1], [0, 0, 1, 1], [], []>} : vector<8x128xf32>, vector<128x128xf32>, vector<8x128xf32> -> vector<8x128xf32>
      %c0_62 = arith.constant 0 : index
      %c0_63 = arith.constant 0 : index
      %83 = vector.load %arg8[%c0_62, %c0_63] : memref<1x128xf32, #tpu.memory_space<vmem>>, vector<1x128xf32>
      %84 = vector.broadcast %83 : vector<1x128xf32> to vector<8x128xf32>
      %85 = arith.addf %82, %84 : vector<8x128xf32>
      %c0_64 = arith.constant 0 : index
      %c0_65 = arith.constant 0 : index
      %86 = vector.load %arg9[%c0_64, %c0_65] : memref<8x128xf32, #tpu.memory_space<vmem>>, vector<8x128xf32>
      tpu.vector_store %arg9[%c0_64, %c0_65], %85 {strides = array<i32>} : memref<8x128xf32, #tpu.memory_space<vmem>>, vector<8x128xf32>,
    } else {
    }
    return
  }
  func.func @transform_0(%arg0: i32, %arg1: i32) -> (i32, i32, i32, i32) {
    %c0_i32 = arith.constant 0 : i32
    %c0_i32_0 = arith.constant 0 : i32
    %c0_i32_1 = arith.constant 0 : i32
    return %arg1, %arg0, %c0_i32, %c0_i32_0 : i32, i32, i32, i32
  }
  func.func @transform_1(%arg0: i32, %arg1: i32) -> (i32, i32) {
    %c0_i32 = arith.constant 0 : i32
    %c0_i32_0 = arith.constant 0 : i32
    return %arg0, %c0_i32 : i32, i32
  }
  func.func @transform_2(%arg0: i32, %arg1: i32) -> (i32, i32) {
    %c0_i32 = arith.constant 0 : i32
    %c0_i32_0 = arith.constant 0 : i32
    %c0_i32_1 = arith.constant 0 : i32
    return %c0_i32, %c0_i32_0 : i32, i32
  }
  func.func @transform_3(%arg0: i32, %arg1: i32) -> (i32, i32) {
    %c0_i32 = arith.constant 0 : i32
    %c0_i32_0 = arith.constant 0 : i32
    %c0_i32_1 = arith.constant 0 : i32
    return %c0_i32, %c0_i32_0 : i32, i32
  }
  func.func @transform_4(%arg0: i32, %arg1: i32) -> (i32, i32) {
    %c0_i32 = arith.constant 0 : i32
    %c0_i32_0 = arith.constant 0 : i32
    %c0_i32_1 = arith.constant 0 : i32
    return %c0_i32, %c0_i32_0 : i32, i32
  }
  func.func @transform_5(%arg0: i32, %arg1: i32) -> (i32, i32) {
    %c0_i32 = arith.constant 0 : i32
    %c0_i32_0 = arith.constant 0 : i32
    %c0_i32_1 = arith.constant 0 : i32
    return %c0_i32, %c0_i32_0 : i32, i32
  }
  func.func @transform_6(%arg0: i32, %arg1: i32) -> (i32, i32) {
    %c0_i32 = arith.constant 0 : i32
    %c0_i32_0 = arith.constant 0 : i32
    %c0_i32_1 = arith.constant 0 : i32
    return %c0_i32, %c0_i32_0 : i32, i32
  }
  func.func @transform_7(%arg0: i32, %arg1: i32) -> (i32, i32) {
    %c0_i32 = arith.constant 0 : i32
    %c0_i32_0 = arith.constant 0 : i32
    return %arg0, %c0_i32 : i32, i32
  }
  func.func @transform_8(%arg0: i32, %arg1: i32) -> (i32, i32) {
    %c0_i32 = arith.constant 0 : i32
    %c0_i32_0 = arith.constant 0 : i32
    return %arg0, %c0_i32 : i32, i32
  }
}

</mosaic_0001>

<llo_original>
// kernel: rnn_forward.1
$region0: #{rnn_forward.1}
  #allocation0 [shape = 'u32[]', space=smem, size = 0x4, offset = 0x4, fixed_abs, tag = 'smem constant byte address 0x4 - core index']
  #allocation1 [shape = 'u32[144,128]{1,0:T(1,128)}', space=vmem, size = 0x12000, scoped, tag = 'internal scratch']
  #allocation2 [shape = 'f32[8,128]{1,0:T(8,128)}', space=vmem, size = 0x1000, scoped, tag = 'scratch operand']
  #allocation3 [shape = 'f32[64,128]{1,0:T(8,128)}', space=vmem, size = 0x8000, scoped, tag = 'scratch operand']
  %s0 = inlined_call_operand.vmem [shape: f32[1,1,64,8], index: 0, kind: input, shape index: {}]
  %s1 = inlined_call_operand.vmem [shape: f32[8,128], index: 1, kind: input, shape index: {}, may-alias: {1,8}]
  %s2 = inlined_call_operand.vmem [shape: f32[8,128], index: 2, kind: input, shape index: {}]
  %s3 = inlined_call_operand.hbm [shape: f32[128,128], index: 3, kind: input, shape index: {}]
  %s4 = inlined_call_operand.vmem [shape: f32[1,128], index: 4, kind: input, shape index: {}]
  %s5 = inlined_call_operand.hbm [shape: f32[128,128], index: 5, kind: input, shape index: {}]
  %s6 = inlined_call_operand.vmem [shape: f32[1,128], index: 6, kind: input, shape index: {}]
  %s7 = inlined_call_operand.vmem [shape: f32[8,128], index: 7, kind: output, shape index: {0}]
  %s8 = inlined_call_operand.vmem [shape: f32[8,128], index: 8, kind: output, shape index: {1}, may-alias: {1,8}]
  %9 = xla_tuple %s7, %s8
  %s10 = sld [smem:[#allocation0]]
  $region62: #{rnn_forward.1} parent=0
    _
  %s12 = ssub.s32 1, %s10
  %s13 = scalar_select 0, %s12, %s10
  $region1: #{rnn_forward.1} parent=0
    #allocation4 [shape = 'u8[65536]{0}', space=vmem, size = 0x10000, scoped, tag = 'input window, operand 3, single buffered']
    #allocation5 [shape = 's32[1]{0}', space=sflag, size = 0x4, scoped, tag = 'scoped memory for rnn_forward.1']
    #allocation6 [shape = 'u8[65536]{0}', space=vmem, size = 0x10000, scoped, tag = 'input window, operand 5, single buffered']
    #allocation7 [shape = 's32[1]{0}', space=sflag, size = 0x4, scoped, tag = 'scoped memory for rnn_forward.1']
    %14 = vsyncpa [#allocation5], 0
    %15 = vsyncpa [#allocation7], 0
    // Predicated region
    $region2: #{rnn_forward.1} parent=1 // pred_check
      _
    $region3: #{rnn_forward.1} parent=1 // pred_check_branch
      %17 = sbr.rel (0) target = $region5
    $region4: #{rnn_forward.1} parent=1 // pred_region
      _
    $region5: #{rnn_forward.1} parent=1 // pred_fallthru
      _
    // Predicated region
    $region6: #{rnn_forward.1} parent=1 // pred_check
      _
    $region7: #{rnn_forward.1} parent=1 // pred_check_branch
      %19 = sbr.rel (0) target = $region9
    $region8: #{rnn_forward.1} parent=1 // pred_region
      _
    $region9: #{rnn_forward.1} parent=1 // pred_fallthru
      _
    // Predicated region
    $region10: #{rnn_forward.1} parent=1 // pred_check
      _
    $region11: #{rnn_forward.1} parent=1 // pred_check_branch
      %21 = sbr.rel (0) target = $region13
    $region12: #{rnn_forward.1} parent=1 // pred_region
      _
    $region13: #{rnn_forward.1} parent=1 // pred_fallthru
      _
    // Predicated region
    $region14: #{rnn_forward.1} parent=1 // pred_check
      _
    $region15: #{rnn_forward.1} parent=1 // pred_check_branch
      %23 = sbr.rel (0) target = $region17
    $region16: #{rnn_forward.1} parent=1 // pred_region
      %s25 = ssub.s32 2048, 2048
      %26 = vsyncadd [#allocation5], %s25
      %s27 = sshll.u32 [#allocation4], 4
      %s28 = int_to_ptr.vmem [resolvable:$true] %s27
      %33 = dma.hbm_to_vmem [thread:$0]  %s3, 2048, %s28, [#allocation5], 128, 128, 8
    $region17: #{rnn_forward.1} parent=1 // pred_fallthru
      _
    // Predicated region
    $region18: #{rnn_forward.1} parent=1 // pred_check
      _
    $region19: #{rnn_forward.1} parent=1 // pred_check_branch
      %35 = sbr.rel (0) target = $region21
    $region20: #{rnn_forward.1} parent=1 // pred_region
      _
    $region21: #{rnn_forward.1} parent=1 // pred_fallthru
      _
    // Predicated region
    $region22: #{rnn_forward.1} parent=1 // pred_check
      _
    $region23: #{rnn_forward.1} parent=1 // pred_check_branch
      %37 = sbr.rel (0) target = $region25
    $region24: #{rnn_forward.1} parent=1 // pred_region
      %s39 = ssub.s32 2048, 2048
      %40 = vsyncadd [#allocation7], %s39
      %s41 = sshll.u32 [#allocation6], 4
      %s42 = int_to_ptr.vmem [resolvable:$true] %s41
      %47 = dma.hbm_to_vmem [thread:$0]  %s5, 2048, %s42, [#allocation7], 128, 128, 8
    $region25: #{rnn_forward.1} parent=1 // pred_fallthru
      _
    // Predicated region
    $region26: #{rnn_forward.1} parent=1 // pred_check
      _
    $region27: #{rnn_forward.1} parent=1 // pred_check_branch
      %49 = sbr.rel (0) target = $region29
    $region28: #{rnn_forward.1} parent=1 // pred_region
      _
    $region29: #{rnn_forward.1} parent=1 // pred_fallthru
      _
    // Predicated region
    $region30: #{rnn_forward.1} parent=1 // pred_check
      _
    $region31: #{rnn_forward.1} parent=1 // pred_check_branch
      %51 = sbr.rel (0) target = $region33
    $region32: #{rnn_forward.1} parent=1 // pred_region
      %52 = dma.done [#allocation5], 2048
    $region33: #{rnn_forward.1} parent=1 // pred_fallthru
      _
    // Predicated region
    $region34: #{rnn_forward.1} parent=1 // pred_check
      _
    $region35: #{rnn_forward.1} parent=1 // pred_check_branch
      %54 = sbr.rel (0) target = $region37
    $region36: #{rnn_forward.1} parent=1 // pred_region
      %55 = dma.done [#allocation7], 2048
    $region37: #{rnn_forward.1} parent=1 // pred_fallthru
      _
    %p56 = scmp.eq.s32.totalorder 0, 0
    // Predicated region
    $region38: #{rnn_forward.1} parent=1 // pred_check
      %p57 = pneg %p56
    $region39: #{rnn_forward.1} parent=1 // pred_check_branch
      %59 = sbr.rel (%p57) target = $region41
    $region40: #{rnn_forward.1} parent=1 // pred_region
      %v60 = vld [vmem:[%s1] sm:$0xff]
      %61 = vst [vmem:[#allocation2] sm:$0xff] %v60
    $region41: #{rnn_forward.1} parent=1 // pred_fallthru
      _
    %v62 = vld [vmem:[%s0] sm:$0xff]
    %v63 = vld [vmem:[%s0 + $0x8] sm:$0xff]
    %v64 = vld [vmem:[%s0 + $0x10] sm:$0xff]
    %v65 = vld [vmem:[%s0 + $0x18] sm:$0xff]
    %v66 = vld [vmem:[%s0 + $0x20] sm:$0xff]
    %v67 = vld [vmem:[%s0 + $0x28] sm:$0xff]
    %v68 = vld [vmem:[%s0 + $0x30] sm:$0xff]
    %v69 = vld [vmem:[%s0 + $0x38] sm:$0xff]
    %v70 = vld [vmem:[%s2] sm:$0xff]
    %v71 = vld [vmem:[%s4] sm:$0x1]
    %v73 = vlaneseq
    %v74 = vshrl.u32 %v73, 7
    %v75 = vsub.s32 0, %v74
    %v76 = vrot.slane %v71, %v75
    %vm78 = vcmask 64512
    %v80 = vsel %vm78, %v62, 0
    %v83 = vsel %vm78, %v63, 0
    %v86 = vsel %vm78, %v64, 0
    %v89 = vsel %vm78, %v65, 0
    %v92 = vsel %vm78, %v66, 0
    %v95 = vsel %vm78, %v67, 0
    %v98 = vsel %vm78, %v68, 0
    %v101 = vsel %vm78, %v69, 0
    %103 = vmatprep.subr.mxu0 0.0
    %104 = vmatpush1.msra.mxu0 0.0
    %105 = vmatprep.subr.mxu0 0.0
    %106 = vmatpush1.msra.mxu0 0.0
    %107 = vmatprep.subr.mxu0 0.0
    %108 = vmatpush1.msra.mxu0 0.0
    %109 = vmatprep.subr.mxu0 0.0
    %110 = vmatpush1.msra.mxu0 0.0
    %111 = vmatprep.subr.mxu0 0.0
    %112 = vmatpush1.msra.mxu0 0.0
    %113 = vmatprep.subr.mxu0 0.0
    %114 = vmatpush1.msra.mxu0 0.0
    %115 = vmatprep.subr.mxu0 0.0
    %116 = vmatpush1.msra.mxu0 0.0
    %117 = vmatprep.subr.mxu0 0.0
    %118 = vmatpush1.msra.mxu0 0.0
    %119 = vmatprep.subr.mxu0 0.0
    %120 = vmatpush1.msra.mxu0 0.0
    %121 = vmatprep.subr.mxu0 0.0
    %122 = vmatpush1.msra.mxu0 0.0
    %123 = vmatprep.subr.mxu0 0.0
    %124 = vmatpush1.msra.mxu0 0.0
    %125 = vmatprep.subr.mxu0 0.0
    %126 = vmatpush1.msra.mxu0 0.0
    %127 = vmatprep.subr.mxu0 0.0
    %128 = vmatpush1.msra.mxu0 0.0
    %129 = vmatprep.subr.mxu0 0.0
    %130 = vmatpush1.msra.mxu0 0.0
    %131 = vmatprep.subr.mxu0 0.0
    %132 = vmatpush1.msra.mxu0 0.0
    %133 = vmatprep.subr.mxu0 0.0
    %134 = vmatpush1.msra.mxu0 %v70
    %135 = vmatprep.subr.mxu0 0.0
    %136 = vmatpush2.msra.mxu0 0.0
    %137 = vmatprep.subr.mxu0 0.0
    %138 = vmatpush2.msra.mxu0 0.0
    %139 = vmatprep.subr.mxu0 0.0
    %140 = vmatpush2.msra.mxu0 0.0
    %141 = vmatprep.subr.mxu0 0.0
    %142 = vmatpush2.msra.mxu0 0.0
    %143 = vmatprep.subr.mxu0 0.0
    %144 = vmatpush2.msra.mxu0 0.0
    %145 = vmatprep.subr.mxu0 0.0
    %146 = vmatpush2.msra.mxu0 0.0
    %147 = vmatprep.subr.mxu0 0.0
    %148 = vmatpush2.msra.mxu0 0.0
    %149 = vmatprep.subr.mxu0 0.0
    %150 = vmatpush2.msra.mxu0 0.0
    %151 = vmatprep.subr.mxu0 0.0
    %152 = vmatpush2.msra.mxu0 0.0
    %153 = vmatprep.subr.mxu0 0.0
    %154 = vmatpush2.msra.mxu0 0.0
    %155 = vmatprep.subr.mxu0 0.0
    %156 = vmatpush2.msra.mxu0 0.0
    %157 = vmatprep.subr.mxu0 0.0
    %158 = vmatpush2.msra.mxu0 0.0
    %159 = vmatprep.subr.mxu0 0.0
    %160 = vmatpush2.msra.mxu0 0.0
    %161 = vmatprep.subr.mxu0 0.0
    %162 = vmatpush2.msra.mxu0 0.0
    %163 = vmatprep.subr.mxu0 0.0
    %164 = vmatpush2.msra.mxu0 0.0
    %165 = vmatprep.subr.mxu0 0.0
    %166 = vmatpush2.msra.mxu0 0.0
    %167 = vmatprep.mubr.f32.mxu0 0.0
    %168 = vmatmul.mubr.f32.gmra.mxu0 %v80
    %v169 = vpop.f32.mrf.mxu0
    %v170 = vadd.f32 %v76, %v169
    %v171 = vpop.f32.mrf.mxu0
    %172 = vmatprep.mubr.f32.mxu0 0.0
    %173 = vmatmul.mubr.f32.gmra.mxu0 %v83
    %v174 = vpop.f32.mrf.mxu0
    %v175 = vadd.f32 %v76, %v174
    %v176 = vpop.f32.mrf.mxu0
    %177 = vmatprep.mubr.f32.mxu0 0.0
    %178 = vmatmul.mubr.f32.gmra.mxu0 %v86
    %v179 = vpop.f32.mrf.mxu0
    %v180 = vadd.f32 %v76, %v179
    %v181 = vpop.f32.mrf.mxu0
    %182 = vmatprep.mubr.f32.mxu0 0.0
    %183 = vmatmul.mubr.f32.gmra.mxu0 %v89
    %v184 = vpop.f32.mrf.mxu0
    %v185 = vadd.f32 %v76, %v184
    %v186 = vpop.f32.mrf.mxu0
    %187 = vmatprep.mubr.f32.mxu0 0.0
    %188 = vmatmul.mubr.f32.gmra.mxu0 %v92
    %v189 = vpop.f32.mrf.mxu0
    %v190 = vadd.f32 %v76, %v189
    %v191 = vpop.f32.mrf.mxu0
    %192 = vmatprep.mubr.f32.mxu0 0.0
    %193 = vmatmul.mubr.f32.gmra.mxu0 %v95
    %v194 = vpop.f32.mrf.mxu0
    %v195 = vadd.f32 %v76, %v194
    %v196 = vpop.f32.mrf.mxu0
    %197 = vmatprep.mubr.f32.mxu0 0.0
    %198 = vmatmul.mubr.f32.gmra.mxu0 %v98
    %v199 = vpop.f32.mrf.mxu0
    %v200 = vadd.f32 %v76, %v199
    %v201 = vpop.f32.mrf.mxu0
    %202 = vmatprep.mubr.f32.mxu0 0.0
    %203 = vmatmul.mubr.f32.gmra.mxu0 %v101
    %v204 = vpop.f32.mrf.mxu0
    %v205 = vadd.f32 %v76, %v204
    %v206 = vpop.f32.mrf.mxu0
    %207 = vdwg.mxu0
    %208 = vst [vmem:[#allocation3] sm:$0xff] %v170
    %209 = vst [vmem:[#allocation3 + $0x8] sm:$0xff] %v175
    %210 = vst [vmem:[#allocation3 + $0x10] sm:$0xff] %v180
    %211 = vst [vmem:[#allocation3 + $0x18] sm:$0xff] %v185
    %212 = vst [vmem:[#allocation3 + $0x20] sm:$0xff] %v190
    %213 = vst [vmem:[#allocation3 + $0x28] sm:$0xff] %v195
    %214 = vst [vmem:[#allocation3 + $0x30] sm:$0xff] %v200
    %215 = vst [vmem:[#allocation3 + $0x38] sm:$0xff] %v205
    %v216 = vld [vmem:[#allocation2] sm:$0xff]
    %v217 = vld [vmem:[#allocation3] sm:$0xff]
    %v218 = vld [vmem:[#allocation4] sm:$0xff]
    %v219 = vld [vmem:[#allocation4 + $0x8] sm:$0xff]
    %v220 = vld [vmem:[#allocation4 + $0x10] sm:$0xff]
    %v221 = vld [vmem:[#allocation4 + $0x18] sm:$0xff]
    %v222 = vld [vmem:[#allocation4 + $0x20] sm:$0xff]
    %v223 = vld [vmem:[#allocation4 + $0x28] sm:$0xff]
    %v224 = vld [vmem:[#allocation4 + $0x30] sm:$0xff]
    %v225 = vld [vmem:[#allocation4 + $0x38] sm:$0xff]
    %v226 = vld [vmem:[#allocation4 + $0x40] sm:$0xff]
    %v227 = vld [vmem:[#allocation4 + $0x48] sm:$0xff]
    %v228 = vld [vmem:[#allocation4 + $0x50] sm:$0xff]
    %v229 = vld [vmem:[#allocation4 + $0x58] sm:$0xff]
    %v230 = vld [vmem:[#allocation4 + $0x60] sm:$0xff]
    %v231 = vld [vmem:[#allocation4 + $0x68] sm:$0xff]
    %v232 = vld [vmem:[#allocation4 + $0x70] sm:$0xff]
    %v233 = vld [vmem:[#allocation4 + $0x78] sm:$0xff]
    %234 = vmatprep.subr.mxu0 0.0
    %235 = vmatpush1.msra.mxu0 %v233
    %236 = vmatprep.subr.mxu0 0.0
    %237 = vmatpush1.msra.mxu0 %v232
    %238 = vmatprep.subr.mxu0 0.0
    %239 = vmatpush1.msra.mxu0 %v231
    %240 = vmatprep.subr.mxu0 0.0
    %241 = vmatpush1.msra.mxu0 %v230
    %242 = vmatprep.subr.mxu0 0.0
    %243 = vmatpush1.msra.mxu0 %v229
    %244 = vmatprep.subr.mxu0 0.0
    %245 = vmatpush1.msra.mxu0 %v228
    %246 = vmatprep.subr.mxu0 0.0
    %247 = vmatpush1.msra.mxu0 %v227
    %248 = vmatprep.subr.mxu0 0.0
    %249 = vmatpush1.msra.mxu0 %v226
    %250 = vmatprep.subr.mxu0 0.0
    %251 = vmatpush1.msra.mxu0 %v225
    %252 = vmatprep.subr.mxu0 0.0
    %253 = vmatpush1.msra.mxu0 %v224
    %254 = vmatprep.subr.mxu0 0.0
    %255 = vmatpush1.msra.mxu0 %v223
    %256 = vmatprep.subr.mxu0 0.0
    %257 = vmatpush1.msra.mxu0 %v222
    %258 = vmatprep.subr.mxu0 0.0
    %259 = vmatpush1.msra.mxu0 %v221
    %260 = vmatprep.subr.mxu0 0.0
    %261 = vmatpush1.msra.mxu0 %v220
    %262 = vmatprep.subr.mxu0 0.0
    %263 = vmatpush1.msra.mxu0 %v219
    %264 = vmatprep.subr.mxu0 0.0
    %265 = vmatpush1.msra.mxu0 %v218
    %266 = vmatprep.subr.mxu0 0.0
    %267 = vmatpush2.msra.mxu0 0.0
    %268 = vmatprep.subr.mxu0 0.0
    %269 = vmatpush2.msra.mxu0 0.0
    %270 = vmatprep.subr.mxu0 0.0
    %271 = vmatpush2.msra.mxu0 0.0
    %272 = vmatprep.subr.mxu0 0.0
    %273 = vmatpush2.msra.mxu0 0.0
    %274 = vmatprep.subr.mxu0 0.0
    %275 = vmatpush2.msra.mxu0 0.0
    %276 = vmatprep.subr.mxu0 0.0
    %277 = vmatpush2.msra.mxu0 0.0
    %278 = vmatprep.subr.mxu0 0.0
    %279 = vmatpush2.msra.mxu0 0.0
    %280 = vmatprep.subr.mxu0 0.0
    %281 = vmatpush2.msra.mxu0 0.0
    %282 = vmatprep.subr.mxu0 0.0
    %283 = vmatpush2.msra.mxu0 0.0
    %284 = vmatprep.subr.mxu0 0.0
    %285 = vmatpush2.msra.mxu0 0.0
    %286 = vmatprep.subr.mxu0 0.0
    %287 = vmatpush2.msra.mxu0 0.0
    %288 = vmatprep.subr.mxu0 0.0
    %289 = vmatpush2.msra.mxu0 0.0
    %290 = vmatprep.subr.mxu0 0.0
    %291 = vmatpush2.msra.mxu0 0.0
    %292 = vmatprep.subr.mxu0 0.0
    %293 = vmatpush2.msra.mxu0 0.0
    %294 = vmatprep.subr.mxu0 0.0
    %295 = vmatpush2.msra.mxu0 0.0
    %296 = vmatprep.subr.mxu0 0.0
    %297 = vmatpush2.msra.mxu0 0.0
    %298 = vmatprep.mubr.f32.mxu0 0.0
    %299 = vmatmul.mubr.f32.gmra.mxu0 %v216
    %v300 = vpop.f32.mrf.mxu0
    %v301 = vadd.f32 0.0, %v300
    %v302 = vpop.f32.mrf.mxu0
    %303 = vdwg.mxu0
    %v304 = vadd.f32 %v217, %v301
    %v305 = vtanh.pop %v304
    %s306 = scalar_lea.vmem [#allocation3], 8
    %v307 = vld [vmem:[%s306] sm:$0xff]
    %308 = vmatprep.subr.mxu0 0.0
    %309 = vmatpush1.msra.mxu0 %v233
    %310 = vmatprep.subr.mxu0 0.0
    %311 = vmatpush1.msra.mxu0 %v232
    %312 = vmatprep.subr.mxu0 0.0
    %313 = vmatpush1.msra.mxu0 %v231
    %314 = vmatprep.subr.mxu0 0.0
    %315 = vmatpush1.msra.mxu0 %v230
    %316 = vmatprep.subr.mxu0 0.0
    %317 = vmatpush1.msra.mxu0 %v229
    %318 = vmatprep.subr.mxu0 0.0
    %319 = vmatpush1.msra.mxu0 %v228
    %320 = vmatprep.subr.mxu0 0.0
    %321 = vmatpush1.msra.mxu0 %v227
    %322 = vmatprep.subr.mxu0 0.0
    %323 = vmatpush1.msra.mxu0 %v226
    %324 = vmatprep.subr.mxu0 0.0
    %325 = vmatpush1.msra.mxu0 %v225
    %326 = vmatprep.subr.mxu0 0.0
    %327 = vmatpush1.msra.mxu0 %v224
    %328 = vmatprep.subr.mxu0 0.0
    %329 = vmatpush1.msra.mxu0 %v223
    %330 = vmatprep.subr.mxu0 0.0
    %331 = vmatpush1.msra.mxu0 %v222
    %332 = vmatprep.subr.mxu0 0.0
    %333 = vmatpush1.msra.mxu0 %v221
    %334 = vmatprep.subr.mxu0 0.0
    %335 = vmatpush1.msra.mxu0 %v220
    %336 = vmatprep.subr.mxu0 0.0
    %337 = vmatpush1.msra.mxu0 %v219
    %338 = vmatprep.subr.mxu0 0.0
    %339 = vmatpush1.msra.mxu0 %v218
    %340 = vmatprep.subr.mxu0 0.0
    %341 = vmatpush2.msra.mxu0 0.0
    %342 = vmatprep.subr.mxu0 0.0
    %343 = vmatpush2.msra.mxu0 0.0
    %344 = vmatprep.subr.mxu0 0.0
    %345 = vmatpush2.msra.mxu0 0.0
    %346 = vmatprep.subr.mxu0 0.0
    %347 = vmatpush2.msra.mxu0 0.0
    %348 = vmatprep.subr.mxu0 0.0
    %349 = vmatpush2.msra.mxu0 0.0
    %350 = vmatprep.subr.mxu0 0.0
    %351 = vmatpush2.msra.mxu0 0.0
    %352 = vmatprep.subr.mxu0 0.0
    %353 = vmatpush2.msra.mxu0 0.0
    %354 = vmatprep.subr.mxu0 0.0
    %355 = vmatpush2.msra.mxu0 0.0
    %356 = vmatprep.subr.mxu0 0.0
    %357 = vmatpush2.msra.mxu0 0.0
    %358 = vmatprep.subr.mxu0 0.0
    %359 = vmatpush2.msra.mxu0 0.0
    %360 = vmatprep.subr.mxu0 0.0
    %361 = vmatpush2.msra.mxu0 0.0
    %362 = vmatprep.subr.mxu0 0.0
    %363 = vmatpush2.msra.mxu0 0.0
    %364 = vmatprep.subr.mxu0 0.0
    %365 = vmatpush2.msra.mxu0 0.0
    %366 = vmatprep.subr.mxu0 0.0
    %367 = vmatpush2.msra.mxu0 0.0
    %368 = vmatprep.subr.mxu0 0.0
    %369 = vmatpush2.msra.mxu0 0.0
    %370 = vmatprep.subr.mxu0 0.0
    %371 = vmatpush2.msra.mxu0 0.0
    %372 = vmatprep.mubr.f32.mxu0 0.0
    %373 = vmatmul.mubr.f32.gmra.mxu0 %v305
    %v374 = vpop.f32.mrf.mxu0
    %v375 = vadd.f32 0.0, %v374
    %v376 = vpop.f32.mrf.mxu0
    %377 = vdwg.mxu0
    %v378 = vadd.f32 %v307, %v375
    %v379 = vtanh.pop %v378
    %s380 = scalar_lea.vmem [#allocation3], 16
    %v381 = vld [vmem:[%s380] sm:$0xff]
    %382 = vmatprep.subr.mxu0 0.0
    %383 = vmatpush1.msra.mxu0 %v233
    %384 = vmatprep.subr.mxu0 0.0
    %385 = vmatpush1.msra.mxu0 %v232
    %386 = vmatprep.subr.mxu0 0.0
    %387 = vmatpush1.msra.mxu0 %v231
    %388 = vmatprep.subr.mxu0 0.0
    %389 = vmatpush1.msra.mxu0 %v230
    %390 = vmatprep.subr.mxu0 0.0
    %391 = vmatpush1.msra.mxu0 %v229
    %392 = vmatprep.subr.mxu0 0.0
    %393 = vmatpush1.msra.mxu0 %v228
    %394 = vmatprep.subr.mxu0 0.0
    %395 = vmatpush1.msra.mxu0 %v227
    %396 = vmatprep.subr.mxu0 0.0
    %397 = vmatpush1.msra.mxu0 %v226
    %398 = vmatprep.subr.mxu0 0.0
    %399 = vmatpush1.msra.mxu0 %v225
    %400 = vmatprep.subr.mxu0 0.0
    %401 = vmatpush1.msra.mxu0 %v224
    %402 = vmatprep.subr.mxu0 0.0
    %403 = vmatpush1.msra.mxu0 %v223
    %404 = vmatprep.subr.mxu0 0.0
    %405 = vmatpush1.msra.mxu0 %v222
    %406 = vmatprep.subr.mxu0 0.0
    %407 = vmatpush1.msra.mxu0 %v221
    %408 = vmatprep.subr.mxu0 0.0
    %409 = vmatpush1.msra.mxu0 %v220
    %410 = vmatprep.subr.mxu0 0.0
    %411 = vmatpush1.msra.mxu0 %v219
    %412 = vmatprep.subr.mxu0 0.0
    %413 = vmatpush1.msra.mxu0 %v218
    %414 = vmatprep.subr.mxu0 0.0
    %415 = vmatpush2.msra.mxu0 0.0
    %416 = vmatprep.subr.mxu0 0.0
    %417 = vmatpush2.msra.mxu0 0.0
    %418 = vmatprep.subr.mxu0 0.0
    %419 = vmatpush2.msra.mxu0 0.0
    %420 = vmatprep.subr.mxu0 0.0
    %421 = vmatpush2.msra.mxu0 0.0
    %422 = vmatprep.subr.mxu0 0.0
    %423 = vmatpush2.msra.mxu0 0.0
    %424 = vmatprep.subr.mxu0 0.0
    %425 = vmatpush2.msra.mxu0 0.0
    %426 = vmatprep.subr.mxu0 0.0
    %427 = vmatpush2.msra.mxu0 0.0
    %428 = vmatprep.subr.mxu0 0.0
    %429 = vmatpush2.msra.mxu0 0.0
    %430 = vmatprep.subr.mxu0 0.0
    %431 = vmatpush2.msra.mxu0 0.0
    %432 = vmatprep.subr.mxu0 0.0
    %433 = vmatpush2.msra.mxu0 0.0
    %434 = vmatprep.subr.mxu0 0.0
    %435 = vmatpush2.msra.mxu0 0.0
    %436 = vmatprep.subr.mxu0 0.0
    %437 = vmatpush2.msra.mxu0 0.0
    %438 = vmatprep.subr.mxu0 0.0
    %439 = vmatpush2.msra.mxu0 0.0
    %440 = vmatprep.subr.mxu0 0.0
    %441 = vmatpush2.msra.mxu0 0.0
    %442 = vmatprep.subr.mxu0 0.0
    %443 = vmatpush2.msra.mxu0 0.0
    %444 = vmatprep.subr.mxu0 0.0
    %445 = vmatpush2.msra.mxu0 0.0
    %446 = vmatprep.mubr.f32.mxu0 0.0
    %447 = vmatmul.mubr.f32.gmra.mxu0 %v379
    %v448 = vpop.f32.mrf.mxu0
    %v449 = vadd.f32 0.0, %v448
    %v450 = vpop.f32.mrf.mxu0
    %451 = vdwg.mxu0
    %v452 = vadd.f32 %v381, %v449
    %v453 = vtanh.pop %v452
    %s454 = scalar_lea.vmem [#allocation3], 24
    %v455 = vld [vmem:[%s454] sm:$0xff]
    %456 = vmatprep.subr.mxu0 0.0
    %457 = vmatpush1.msra.mxu0 %v233
    %458 = vmatprep.subr.mxu0 0.0
    %459 = vmatpush1.msra.mxu0 %v232
    %460 = vmatprep.subr.mxu0 0.0
    %461 = vmatpush1.msra.mxu0 %v231
    %462 = vmatprep.subr.mxu0 0.0
    %463 = vmatpush1.msra.mxu0 %v230
    %464 = vmatprep.subr.mxu0 0.0
    %465 = vmatpush1.msra.mxu0 %v229
    %466 = vmatprep.subr.mxu0 0.0
    %467 = vmatpush1.msra.mxu0 %v228
    %468 = vmatprep.subr.mxu0 0.0
    %469 = vmatpush1.msra.mxu0 %v227
    %470 = vmatprep.subr.mxu0 0.0
    %471 = vmatpush1.msra.mxu0 %v226
    %472 = vmatprep.subr.mxu0 0.0
    %473 = vmatpush1.msra.mxu0 %v225
    %474 = vmatprep.subr.mxu0 0.0
    %475 = vmatpush1.msra.mxu0 %v224
    %476 = vmatprep.subr.mxu0 0.0
    %477 = vmatpush1.msra.mxu0 %v223
    %478 = vmatprep.subr.mxu0 0.0
    %479 = vmatpush1.msra.mxu0 %v222
    %480 = vmatprep.subr.mxu0 0.0
    %481 = vmatpush1.msra.mxu0 %v221
    %482 = vmatprep.subr.mxu0 0.0
    %483 = vmatpush1.msra.mxu0 %v220
    %484 = vmatprep.subr.mxu0 0.0
    %485 = vmatpush1.msra.mxu0 %v219
    %486 = vmatprep.subr.mxu0 0.0
    %487 = vmatpush1.msra.mxu0 %v218
    %488 = vmatprep.subr.mxu0 0.0
    %489 = vmatpush2.msra.mxu0 0.0
    %490 = vmatprep.subr.mxu0 0.0
    %491 = vmatpush2.msra.mxu0 0.0
    %492 = vmatprep.subr.mxu0 0.0
    %493 = vmatpush2.msra.mxu0 0.0
    %494 = vmatprep.subr.mxu0 0.0
    %495 = vmatpush2.msra.mxu0 0.0
    %496 = vmatprep.subr.mxu0 0.0
    %497 = vmatpush2.msra.mxu0 0.0
    %498 = vmatprep.subr.mxu0 0.0
    %499 = vmatpush2.msra.mxu0 0.0
    %500 = vmatprep.subr.mxu0 0.0
    %501 = vmatpush2.msra.mxu0 0.0
    %502 = vmatprep.subr.mxu0 0.0
    %503 = vmatpush2.msra.mxu0 0.0
    %504 = vmatprep.subr.mxu0 0.0
    %505 = vmatpush2.msra.mxu0 0.0
    %506 = vmatprep.subr.mxu0 0.0
    %507 = vmatpush2.msra.mxu0 0.0
    %508 = vmatprep.subr.mxu0 0.0
    %509 = vmatpush2.msra.mxu0 0.0
    %510 = vmatprep.subr.mxu0 0.0
    %511 = vmatpush2.msra.mxu0 0.0
    %512 = vmatprep.subr.mxu0 0.0
    %513 = vmatpush2.msra.mxu0 0.0
    %514 = vmatprep.subr.mxu0 0.0
    %515 = vmatpush2.msra.mxu0 0.0
    %516 = vmatprep.subr.mxu0 0.0
    %517 = vmatpush2.msra.mxu0 0.0
    %518 = vmatprep.subr.mxu0 0.0
    %519 = vmatpush2.msra.mxu0 0.0
    %520 = vmatprep.mubr.f32.mxu0 0.0
    %521 = vmatmul.mubr.f32.gmra.mxu0 %v453
    %v522 = vpop.f32.mrf.mxu0
    %v523 = vadd.f32 0.0, %v522
    %v524 = vpop.f32.mrf.mxu0
    %525 = vdwg.mxu0
    %v526 = vadd.f32 %v455, %v523
    %v527 = vtanh.pop %v526
    %s528 = scalar_lea.vmem [#allocation3], 32
    %v529 = vld [vmem:[%s528] sm:$0xff]
    %530 = vmatprep.subr.mxu0 0.0
    %531 = vmatpush1.msra.mxu0 %v233
    %532 = vmatprep.subr.mxu0 0.0
    %533 = vmatpush1.msra.mxu0 %v232
    %534 = vmatprep.subr.mxu0 0.0
    %535 = vmatpush1.msra.mxu0 %v231
    %536 = vmatprep.subr.mxu0 0.0
    %537 = vmatpush1.msra.mxu0 %v230
    %538 = vmatprep.subr.mxu0 0.0
    %539 = vmatpush1.msra.mxu0 %v229
    %540 = vmatprep.subr.mxu0 0.0
    %541 = vmatpush1.msra.mxu0 %v228
    %542 = vmatprep.subr.mxu0 0.0
    %543 = vmatpush1.msra.mxu0 %v227
    %544 = vmatprep.subr.mxu0 0.0
    %545 = vmatpush1.msra.mxu0 %v226
    %546 = vmatprep.subr.mxu0 0.0
    %547 = vmatpush1.msra.mxu0 %v225
    %548 = vmatprep.subr.mxu0 0.0
    %549 = vmatpush1.msra.mxu0 %v224
    %550 = vmatprep.subr.mxu0 0.0
    %551 = vmatpush1.msra.mxu0 %v223
    %552 = vmatprep.subr.mxu0 0.0
    %553 = vmatpush1.msra.mxu0 %v222
    %554 = vmatprep.subr.mxu0 0.0
    %555 = vmatpush1.msra.mxu0 %v221
    %556 = vmatprep.subr.mxu0 0.0
    %557 = vmatpush1.msra.mxu0 %v220
    %558 = vmatprep.subr.mxu0 0.0
    %559 = vmatpush1.msra.mxu0 %v219
    %560 = vmatprep.subr.mxu0 0.0
    %561 = vmatpush1.msra.mxu0 %v218
    %562 = vmatprep.subr.mxu0 0.0
    %563 = vmatpush2.msra.mxu0 0.0
    %564 = vmatprep.subr.mxu0 0.0
    %565 = vmatpush2.msra.mxu0 0.0
    %566 = vmatprep.subr.mxu0 0.0
    %567 = vmatpush2.msra.mxu0 0.0
    %568 = vmatprep.subr.mxu0 0.0
    %569 = vmatpush2.msra.mxu0 0.0
    %570 = vmatprep.subr.mxu0 0.0
    %571 = vmatpush2.msra.mxu0 0.0
    %572 = vmatprep.subr.mxu0 0.0
    %573 = vmatpush2.msra.mxu0 0.0
    %574 = vmatprep.subr.mxu0 0.0
    %575 = vmatpush2.msra.mxu0 0.0
    %576 = vmatprep.subr.mxu0 0.0
    %577 = vmatpush2.msra.mxu0 0.0
    %578 = vmatprep.subr.mxu0 0.0
    %579 = vmatpush2.msra.mxu0 0.0
    %580 = vmatprep.subr.mxu0 0.0
    %581 = vmatpush2.msra.mxu0 0.0
    %582 = vmatprep.subr.mxu0 0.0
    %583 = vmatpush2.msra.mxu0 0.0
    %584 = vmatprep.subr.mxu0 0.0
    %585 = vmatpush2.msra.mxu0 0.0
    %586 = vmatprep.subr.mxu0 0.0
    %587 = vmatpush2.msra.mxu0 0.0
    %588 = vmatprep.subr.mxu0 0.0
    %589 = vmatpush2.msra.mxu0 0.0
    %590 = vmatprep.subr.mxu0 0.0
    %591 = vmatpush2.msra.mxu0 0.0
    %592 = vmatprep.subr.mxu0 0.0
    %593 = vmatpush2.msra.mxu0 0.0
    %594 = vmatprep.mubr.f32.mxu0 0.0
    %595 = vmatmul.mubr.f32.gmra.mxu0 %v527
    %v596 = vpop.f32.mrf.mxu0
    %v597 = vadd.f32 0.0, %v596
    %v598 = vpop.f32.mrf.mxu0
    %599 = vdwg.mxu0
    %v600 = vadd.f32 %v529, %v597
    %v601 = vtanh.pop %v600
    %s602 = scalar_lea.vmem [#allocation3], 40
    %v603 = vld [vmem:[%s602] sm:$0xff]
    %604 = vmatprep.subr.mxu0 0.0
    %605 = vmatpush1.msra.mxu0 %v233
    %606 = vmatprep.subr.mxu0 0.0
    %607 = vmatpush1.msra.mxu0 %v232
    %608 = vmatprep.subr.mxu0 0.0
    %609 = vmatpush1.msra.mxu0 %v231
    %610 = vmatprep.subr.mxu0 0.0
    %611 = vmatpush1.msra.mxu0 %v230
    %612 = vmatprep.subr.mxu0 0.0
    %613 = vmatpush1.msra.mxu0 %v229
    %614 = vmatprep.subr.mxu0 0.0
    %615 = vmatpush1.msra.mxu0 %v228
    %616 = vmatprep.subr.mxu0 0.0
    %617 = vmatpush1.msra.mxu0 %v227
    %618 = vmatprep.subr.mxu0 0.0
    %619 = vmatpush1.msra.mxu0 %v226
    %620 = vmatprep.subr.mxu0 0.0
    %621 = vmatpush1.msra.mxu0 %v225
    %622 = vmatprep.subr.mxu0 0.0
    %623 = vmatpush1.msra.mxu0 %v224
    %624 = vmatprep.subr.mxu0 0.0
    %625 = vmatpush1.msra.mxu0 %v223
    %626 = vmatprep.subr.mxu0 0.0
    %627 = vmatpush1.msra.mxu0 %v222
    %628 = vmatprep.subr.mxu0 0.0
    %629 = vmatpush1.msra.mxu0 %v221
    %630 = vmatprep.subr.mxu0 0.0
    %631 = vmatpush1.msra.mxu0 %v220
    %632 = vmatprep.subr.mxu0 0.0
    %633 = vmatpush1.msra.mxu0 %v219
    %634 = vmatprep.subr.mxu0 0.0
    %635 = vmatpush1.msra.mxu0 %v218
    %636 = vmatprep.subr.mxu0 0.0
    %637 = vmatpush2.msra.mxu0 0.0
    %638 = vmatprep.subr.mxu0 0.0
    %639 = vmatpush2.msra.mxu0 0.0
    %640 = vmatprep.subr.mxu0 0.0
    %641 = vmatpush2.msra.mxu0 0.0
    %642 = vmatprep.subr.mxu0 0.0
    %643 = vmatpush2.msra.mxu0 0.0
    %644 = vmatprep.subr.mxu0 0.0
    %645 = vmatpush2.msra.mxu0 0.0
    %646 = vmatprep.subr.mxu0 0.0
    %647 = vmatpush2.msra.mxu0 0.0
    %648 = vmatprep.subr.mxu0 0.0
    %649 = vmatpush2.msra.mxu0 0.0
    %650 = vmatprep.subr.mxu0 0.0
    %651 = vmatpush2.msra.mxu0 0.0
    %652 = vmatprep.subr.mxu0 0.0
    %653 = vmatpush2.msra.mxu0 0.0
    %654 = vmatprep.subr.mxu0 0.0
    %655 = vmatpush2.msra.mxu0 0.0
    %656 = vmatprep.subr.mxu0 0.0
    %657 = vmatpush2.msra.mxu0 0.0
    %658 = vmatprep.subr.mxu0 0.0
    %659 = vmatpush2.msra.mxu0 0.0
    %660 = vmatprep.subr.mxu0 0.0
    %661 = vmatpush2.msra.mxu0 0.0
    %662 = vmatprep.subr.mxu0 0.0
    %663 = vmatpush2.msra.mxu0 0.0
    %664 = vmatprep.subr.mxu0 0.0
    %665 = vmatpush2.msra.mxu0 0.0
    %666 = vmatprep.subr.mxu0 0.0
    %667 = vmatpush2.msra.mxu0 0.0
    %668 = vmatprep.mubr.f32.mxu0 0.0
    %669 = vmatmul.mubr.f32.gmra.mxu0 %v601
    %v670 = vpop.f32.mrf.mxu0
    %v671 = vadd.f32 0.0, %v670
    %v672 = vpop.f32.mrf.mxu0
    %673 = vdwg.mxu0
    %v674 = vadd.f32 %v603, %v671
    %v675 = vtanh.pop %v674
    %s676 = scalar_lea.vmem [#allocation3], 48
    %v677 = vld [vmem:[%s676] sm:$0xff]
    %678 = vmatprep.subr.mxu0 0.0
    %679 = vmatpush1.msra.mxu0 %v233
    %680 = vmatprep.subr.mxu0 0.0
    %681 = vmatpush1.msra.mxu0 %v232
    %682 = vmatprep.subr.mxu0 0.0
    %683 = vmatpush1.msra.mxu0 %v231
    %684 = vmatprep.subr.mxu0 0.0
    %685 = vmatpush1.msra.mxu0 %v230
    %686 = vmatprep.subr.mxu0 0.0
    %687 = vmatpush1.msra.mxu0 %v229
    %688 = vmatprep.subr.mxu0 0.0
    %689 = vmatpush1.msra.mxu0 %v228
    %690 = vmatprep.subr.mxu0 0.0
    %691 = vmatpush1.msra.mxu0 %v227
    %692 = vmatprep.subr.mxu0 0.0
    %693 = vmatpush1.msra.mxu0 %v226
    %694 = vmatprep.subr.mxu0 0.0
    %695 = vmatpush1.msra.mxu0 %v225
    %696 = vmatprep.subr.mxu0 0.0
    %697 = vmatpush1.msra.mxu0 %v224
    %698 = vmatprep.subr.mxu0 0.0
    %699 = vmatpush1.msra.mxu0 %v223
    %700 = vmatprep.subr.mxu0 0.0
    %701 = vmatpush1.msra.mxu0 %v222
    %702 = vmatprep.subr.mxu0 0.0
    %703 = vmatpush1.msra.mxu0 %v221
    %704 = vmatprep.subr.mxu0 0.0
    %705 = vmatpush1.msra.mxu0 %v220
    %706 = vmatprep.subr.mxu0 0.0
    %707 = vmatpush1.msra.mxu0 %v219
    %708 = vmatprep.subr.mxu0 0.0
    %709 = vmatpush1.msra.mxu0 %v218
    %710 = vmatprep.subr.mxu0 0.0
    %711 = vmatpush2.msra.mxu0 0.0
    %712 = vmatprep.subr.mxu0 0.0
    %713 = vmatpush2.msra.mxu0 0.0
    %714 = vmatprep.subr.mxu0 0.0
    %715 = vmatpush2.msra.mxu0 0.0
    %716 = vmatprep.subr.mxu0 0.0
    %717 = vmatpush2.msra.mxu0 0.0
    %718 = vmatprep.subr.mxu0 0.0
    %719 = vmatpush2.msra.mxu0 0.0
    %720 = vmatprep.subr.mxu0 0.0
    %721 = vmatpush2.msra.mxu0 0.0
    %722 = vmatprep.subr.mxu0 0.0
    %723 = vmatpush2.msra.mxu0 0.0
    %724 = vmatprep.subr.mxu0 0.0
    %725 = vmatpush2.msra.mxu0 0.0
    %726 = vmatprep.subr.mxu0 0.0
    %727 = vmatpush2.msra.mxu0 0.0
    %728 = vmatprep.subr.mxu0 0.0
    %729 = vmatpush2.msra.mxu0 0.0
    %730 = vmatprep.subr.mxu0 0.0
    %731 = vmatpush2.msra.mxu0 0.0
    %732 = vmatprep.subr.mxu0 0.0
    %733 = vmatpush2.msra.mxu0 0.0
    %734 = vmatprep.subr.mxu0 0.0
    %735 = vmatpush2.msra.mxu0 0.0
    %736 = vmatprep.subr.mxu0 0.0
    %737 = vmatpush2.msra.mxu0 0.0
    %738 = vmatprep.subr.mxu0 0.0
    %739 = vmatpush2.msra.mxu0 0.0
    %740 = vmatprep.subr.mxu0 0.0
    %741 = vmatpush2.msra.mxu0 0.0
    %742 = vmatprep.mubr.f32.mxu0 0.0
    %743 = vmatmul.mubr.f32.gmra.mxu0 %v675
    %v744 = vpop.f32.mrf.mxu0
    %v745 = vadd.f32 0.0, %v744
    %v746 = vpop.f32.mrf.mxu0
    %747 = vdwg.mxu0
    %v748 = vadd.f32 %v677, %v745
    %v749 = vtanh.pop %v748
    %s750 = scalar_lea.vmem [#allocation3], 56
    %v751 = vld [vmem:[%s750] sm:$0xff]
    %752 = vmatprep.subr.mxu0 0.0
    %753 = vmatpush1.msra.mxu0 %v233
    %754 = vmatprep.subr.mxu0 0.0
    %755 = vmatpush1.msra.mxu0 %v232
    %756 = vmatprep.subr.mxu0 0.0
    %757 = vmatpush1.msra.mxu0 %v231
    %758 = vmatprep.subr.mxu0 0.0
    %759 = vmatpush1.msra.mxu0 %v230
    %760 = vmatprep.subr.mxu0 0.0
    %761 = vmatpush1.msra.mxu0 %v229
    %762 = vmatprep.subr.mxu0 0.0
    %763 = vmatpush1.msra.mxu0 %v228
    %764 = vmatprep.subr.mxu0 0.0
    %765 = vmatpush1.msra.mxu0 %v227
    %766 = vmatprep.subr.mxu0 0.0
    %767 = vmatpush1.msra.mxu0 %v226
    %768 = vmatprep.subr.mxu0 0.0
    %769 = vmatpush1.msra.mxu0 %v225
    %770 = vmatprep.subr.mxu0 0.0
    %771 = vmatpush1.msra.mxu0 %v224
    %772 = vmatprep.subr.mxu0 0.0
    %773 = vmatpush1.msra.mxu0 %v223
    %774 = vmatprep.subr.mxu0 0.0
    %775 = vmatpush1.msra.mxu0 %v222
    %776 = vmatprep.subr.mxu0 0.0
    %777 = vmatpush1.msra.mxu0 %v221
    %778 = vmatprep.subr.mxu0 0.0
    %779 = vmatpush1.msra.mxu0 %v220
    %780 = vmatprep.subr.mxu0 0.0
    %781 = vmatpush1.msra.mxu0 %v219
    %782 = vmatprep.subr.mxu0 0.0
    %783 = vmatpush1.msra.mxu0 %v218
    %784 = vmatprep.subr.mxu0 0.0
    %785 = vmatpush2.msra.mxu0 0.0
    %786 = vmatprep.subr.mxu0 0.0
    %787 = vmatpush2.msra.mxu0 0.0
    %788 = vmatprep.subr.mxu0 0.0
    %789 = vmatpush2.msra.mxu0 0.0
    %790 = vmatprep.subr.mxu0 0.0
    %791 = vmatpush2.msra.mxu0 0.0
    %792 = vmatprep.subr.mxu0 0.0
    %793 = vmatpush2.msra.mxu0 0.0
    %794 = vmatprep.subr.mxu0 0.0
    %795 = vmatpush2.msra.mxu0 0.0
    %796 = vmatprep.subr.mxu0 0.0
    %797 = vmatpush2.msra.mxu0 0.0
    %798 = vmatprep.subr.mxu0 0.0
    %799 = vmatpush2.msra.mxu0 0.0
    %800 = vmatprep.subr.mxu0 0.0
    %801 = vmatpush2.msra.mxu0 0.0
    %802 = vmatprep.subr.mxu0 0.0
    %803 = vmatpush2.msra.mxu0 0.0
    %804 = vmatprep.subr.mxu0 0.0
    %805 = vmatpush2.msra.mxu0 0.0
    %806 = vmatprep.subr.mxu0 0.0
    %807 = vmatpush2.msra.mxu0 0.0
    %808 = vmatprep.subr.mxu0 0.0
    %809 = vmatpush2.msra.mxu0 0.0
    %810 = vmatprep.subr.mxu0 0.0
    %811 = vmatpush2.msra.mxu0 0.0
    %812 = vmatprep.subr.mxu0 0.0
    %813 = vmatpush2.msra.mxu0 0.0
    %814 = vmatprep.subr.mxu0 0.0
    %815 = vmatpush2.msra.mxu0 0.0
    %816 = vmatprep.mubr.f32.mxu0 0.0
    %817 = vmatmul.mubr.f32.gmra.mxu0 %v749
    %v818 = vpop.f32.mrf.mxu0
    %v819 = vadd.f32 0.0, %v818
    %v820 = vpop.f32.mrf.mxu0
    %821 = vdwg.mxu0
    %v822 = vadd.f32 %v751, %v819
    %v823 = vtanh.pop %v822
    %824 = vst [vmem:[#allocation2] sm:$0xff] %v823
    // Predicated region
    $region42: #{rnn_forward.1} parent=1 // pred_check
      %p825 = pneg %p56
    $region43: #{rnn_forward.1} parent=1 // pred_check_branch
      %827 = sbr.rel (%p825) target = $region45
    $region44: #{rnn_forward.1} parent=1 // pred_region
      %828 = vst [vmem:[%s8] sm:$0xff] %v823
      %v829 = vld [vmem:[#allocation6] sm:$0xff]
      %v830 = vld [vmem:[#allocation6 + $0x8] sm:$0xff]
      %v831 = vld [vmem:[#allocation6 + $0x10] sm:$0xff]
      %v832 = vld [vmem:[#allocation6 + $0x18] sm:$0xff]
      %v833 = vld [vmem:[#allocation6 + $0x20] sm:$0xff]
      %v834 = vld [vmem:[#allocation6 + $0x28] sm:$0xff]
      %v835 = vld [vmem:[#allocation6 + $0x30] sm:$0xff]
      %v836 = vld [vmem:[#allocation6 + $0x38] sm:$0xff]
      %v837 = vld [vmem:[#allocation6 + $0x40] sm:$0xff]
      %v838 = vld [vmem:[#allocation6 + $0x48] sm:$0xff]
      %v839 = vld [vmem:[#allocation6 + $0x50] sm:$0xff]
      %v840 = vld [vmem:[#allocation6 + $0x58] sm:$0xff]
      %v841 = vld [vmem:[#allocation6 + $0x60] sm:$0xff]
      %v842 = vld [vmem:[#allocation6 + $0x68] sm:$0xff]
      %v843 = vld [vmem:[#allocation6 + $0x70] sm:$0xff]
      %v844 = vld [vmem:[#allocation6 + $0x78] sm:$0xff]
      %v845 = vld [vmem:[%s6] sm:$0x1]
      %v847 = vlaneseq
      %v848 = vshrl.u32 %v847, 7
      %v849 = vsub.s32 0, %v848
      %v850 = vrot.slane %v845, %v849
      %852 = vmatprep.subr.mxu0 0.0
      %853 = vmatpush1.msra.mxu0 %v844
      %854 = vmatprep.subr.mxu0 0.0
      %855 = vmatpush1.msra.mxu0 %v843
      %856 = vmatprep.subr.mxu0 0.0
      %857 = vmatpush1.msra.mxu0 %v842
      %858 = vmatprep.subr.mxu0 0.0
      %859 = vmatpush1.msra.mxu0 %v841
      %860 = vmatprep.subr.mxu0 0.0
      %861 = vmatpush1.msra.mxu0 %v840
      %862 = vmatprep.subr.mxu0 0.0
      %863 = vmatpush1.msra.mxu0 %v839
      %864 = vmatprep.subr.mxu0 0.0
      %865 = vmatpush1.msra.mxu0 %v838
      %866 = vmatprep.subr.mxu0 0.0
      %867 = vmatpush1.msra.mxu0 %v837
      %868 = vmatprep.subr.mxu0 0.0
      %869 = vmatpush1.msra.mxu0 %v836
      %870 = vmatprep.subr.mxu0 0.0
      %871 = vmatpush1.msra.mxu0 %v835
      %872 = vmatprep.subr.mxu0 0.0
      %873 = vmatpush1.msra.mxu0 %v834
      %874 = vmatprep.subr.mxu0 0.0
      %875 = vmatpush1.msra.mxu0 %v833
      %876 = vmatprep.subr.mxu0 0.0
      %877 = vmatpush1.msra.mxu0 %v832
      %878 = vmatprep.subr.mxu0 0.0
      %879 = vmatpush1.msra.mxu0 %v831
      %880 = vmatprep.subr.mxu0 0.0
      %881 = vmatpush1.msra.mxu0 %v830
      %882 = vmatprep.subr.mxu0 0.0
      %883 = vmatpush1.msra.mxu0 %v829
      %884 = vmatprep.subr.mxu0 0.0
      %885 = vmatpush2.msra.mxu0 0.0
      %886 = vmatprep.subr.mxu0 0.0
      %887 = vmatpush2.msra.mxu0 0.0
      %888 = vmatprep.subr.mxu0 0.0
      %889 = vmatpush2.msra.mxu0 0.0
      %890 = vmatprep.subr.mxu0 0.0
      %891 = vmatpush2.msra.mxu0 0.0
      %892 = vmatprep.subr.mxu0 0.0
      %893 = vmatpush2.msra.mxu0 0.0
      %894 = vmatprep.subr.mxu0 0.0
      %895 = vmatpush2.msra.mxu0 0.0
      %896 = vmatprep.subr.mxu0 0.0
      %897 = vmatpush2.msra.mxu0 0.0
      %898 = vmatprep.subr.mxu0 0.0
      %899 = vmatpush2.msra.mxu0 0.0
      %900 = vmatprep.subr.mxu0 0.0
      %901 = vmatpush2.msra.mxu0 0.0
      %902 = vmatprep.subr.mxu0 0.0
      %903 = vmatpush2.msra.mxu0 0.0
      %904 = vmatprep.subr.mxu0 0.0
      %905 = vmatpush2.msra.mxu0 0.0
      %906 = vmatprep.subr.mxu0 0.0
      %907 = vmatpush2.msra.mxu0 0.0
      %908 = vmatprep.subr.mxu0 0.0
      %909 = vmatpush2.msra.mxu0 0.0
      %910 = vmatprep.subr.mxu0 0.0
      %911 = vmatpush2.msra.mxu0 0.0
      %912 = vmatprep.subr.mxu0 0.0
      %913 = vmatpush2.msra.mxu0 0.0
      %914 = vmatprep.subr.mxu0 0.0
      %915 = vmatpush2.msra.mxu0 0.0
      %916 = vmatprep.mubr.f32.mxu0 0.0
      %917 = vmatmul.mubr.f32.gmra.mxu0 %v823
      %v918 = vpop.f32.mrf.mxu0
      %v919 = vadd.f32 %v850, %v918
      %v920 = vpop.f32.mrf.mxu0
      %921 = vdwg.mxu0
      %922 = vst [vmem:[%s7] sm:$0xff] %v919
    $region45: #{rnn_forward.1} parent=1 // pred_fallthru
      _
    // Predicated region
    $region46: #{rnn_forward.1} parent=1 // pred_check
      _
    $region47: #{rnn_forward.1} parent=1 // pred_check_branch
      %924 = sbr.rel (0) target = $region49
    $region48: #{rnn_forward.1} parent=1 // pred_region
      _
    $region49: #{rnn_forward.1} parent=1 // pred_fallthru
      _
    // Predicated region
    $region50: #{rnn_forward.1} parent=1 // pred_check
      _
    $region51: #{rnn_forward.1} parent=1 // pred_check_branch
      %926 = sbr.rel (0) target = $region53
    $region52: #{rnn_forward.1} parent=1 // pred_region
      _
    $region53: #{rnn_forward.1} parent=1 // pred_fallthru
      _
    // Predicated region
    $region54: #{rnn_forward.1} parent=1 // pred_check
      _
    $region55: #{rnn_forward.1} parent=1 // pred_check_branch
      %928 = sbr.rel (0) target = $region57
    $region56: #{rnn_forward.1} parent=1 // pred_region
      _
    $region57: #{rnn_forward.1} parent=1 // pred_fallthru
      _
    // Predicated region
    $region58: #{rnn_forward.1} parent=1 // pred_check
      _
    $region59: #{rnn_forward.1} parent=1 // pred_check_branch
      %930 = sbr.rel (0) target = $region61
    $region60: #{rnn_forward.1} parent=1 // pred_region
      _
    $region61: #{rnn_forward.1} parent=1 // pred_fallthru
      _
    %931 = vsyncpa [#allocation5], 1
    %932 = vsyncpa [#allocation7], 1

</llo_original>
